<compile_context>
chip_gen: v6e
topology: v6e:2x2x1
jax: 0.10.0
libtpu: 0.0.40
codegen_flags: <defaults>
</compile_context>

<pallas_src>
import functools

import jax
import jax.numpy as jnp
import numpy as np
from jax.experimental import pallas as pl
from jax.experimental.pallas import tpu as pltpu


def _cdiv(a, b):
    return -(-a // b)


def _round_up(a, m):
    return _cdiv(a, m) * m


def _rot90_perm_matrix(k, groups):
    """Block-diag one-hot P: (x_row @ P) applies rot90 within each K*K group.

    For a single flattened kernel: (x_flat @ P)[i*K + j] == x[j, K-1-i].
    """
    kk = k * k
    p = np.zeros((kk, kk), np.float32)
    for i in range(k):
        for j in range(k):
            p[j * k + (k - 1 - i), i * k + j] = 1.0
    if groups > 1:
        p = np.kron(np.eye(groups, dtype=np.float32), p)
    return p


def _default_n_cores():
    # Only v7x-class chips have 2 TensorCores per chip; on single-TC v5e/v6e a
    # 2-way "parallel" split just adds a clamped duplicate tile.
    try:
        kind = str(jax.devices()[0].device_kind)
    except Exception:  # pragma: no cover - defensive
        return 1
    return 2 if "7" in kind else 1


def _rot_inv_loss_kernel(x_ref, p_ref, o_ref, acc_ref, *,
                         n_packed, tile_rows, acc_rows):
    """Accumulate sum((rot90(x) - x)^2) over this core's packed-row tiles.

    x_ref:   (tile_rows, W) packed input tile, native dtype.
    p_ref:   (W, W) block-diagonal one-hot rot90 permutation (grid-resident).
    o_ref:   (1, 8, 128) f32 per-core output block; partial sum splatted.
    acc_ref: (acc_rows, W) f32 VMEM accumulator (persists across the grid).
    """
    c = pl.program_id(0)            # TensorCore split axis ("parallel")
    t = pl.program_id(1)            # reduction over row tiles ("arbitrary")
    nt = pl.num_programs(1)
    w = x_ref.shape[-1]

    @pl.when(t == 0)
    def _init():
        acc_ref[...] = jnp.zeros_like(acc_ref)

    # Global (unclamped) packed-row offset of this tile.  Tiles fully inside
    # the valid range take the unmasked fast path; only the partial last tile
    # and the clamped duplicate tile (odd split) pay the iota/compare/select.
    row_start = (c * nt + t) * tile_rows
    interior = row_start + tile_rows <= n_packed

    def _accum(x_raw):
        # Permutation matmul in the input's native dtype (bit-exact: one-hot P).
        xmm = x_raw if x_raw.dtype == p_ref.dtype else x_raw.astype(p_ref.dtype)
        rot = jnp.dot(xmm, p_ref[...], preferred_element_type=jnp.float32)
        d = rot - x_raw.astype(jnp.float32)
        dd = d * d
        # Pure-VALU partial reduce (tile_rows -> acc_rows sublanes); the
        # cross-lane/sublane reduce is deferred to the finalize step.
        acc_ref[...] += dd.reshape(-1, acc_rows, w).sum(axis=0)

    @pl.when(interior)
    def _fast():
        _accum(x_ref[...])

    @pl.when(jnp.logical_not(interior))
    def _tail():
        row_ids = row_start + jax.lax.broadcasted_iota(
            jnp.int32, (tile_rows, w), 0)
        valid = row_ids < n_packed
        x_raw = x_ref[...]
        _accum(jnp.where(valid, x_raw, jnp.zeros_like(x_raw)))

    @pl.when(t == nt - 1)
    def _finalize():
        total = jnp.sum(acc_ref[...])      # single cross-lane/sublane reduce
        o_ref[...] = jnp.full(o_ref.shape, total, jnp.float32)


def rotation_invariance_loss(kerns, *, tile_rows_cap=16384, n_cores=None):
    """MSE(rot90(kerns), kerns), mean over all elements. kerns: (..., K, K)."""
    if kerns.ndim < 2:
        raise ValueError(
            "Expecting at least 2D tensor but got shape {}".format(kerns.shape))
    kh, kw = kerns.shape[-2], kerns.shape[-1]
    if kh != kw:
        # TODO(synk): non-square kernels make torch's MSELoss compare mismatched
        # (.., KW, KH) vs (.., KH, KW) shapes; only the square case is implemented.
        raise NotImplementedError("square kernels only")
    k = kh
    kk = k * k

    n_rows = 1
    for s in kerns.shape[:-2]:
        n_rows *= int(s)
    n_rows = max(n_rows, 1)

    # Pack G whole kernels per row to fill the 128-lane vreg.  Choosing G as a
    # divisor of n_rows keeps the reshape FREE (no pad, no extra HBM pass);
    # worst case (prime n_rows) degrades gracefully to G=1.
    g_max = max(1, 128 // kk)
    G = 1
    for g in range(min(g_max, n_rows), 0, -1):
        if n_rows % g == 0:
            G = g
            break
    W = G * kk
    n_packed = n_rows // G

    # Free reshape: native HBM layout + native dtype (no transpose, no cast).
    x = kerns.reshape(n_packed, W)

    if n_cores is None:
        n_cores = _default_n_cores()
    n_cores = max(1, int(n_cores))

    # Row tile: multiple of 8 sublanes (or full row count for tiny inputs),
    # capped so the double-buffered input stays well inside VMEM on all chips.
    itemsize = jnp.dtype(kerns.dtype).itemsize
    bytes_per_row = _round_up(W, 128) * itemsize
    vmem_rows = max(8, ((8 * 1024 * 1024) // max(bytes_per_row, 1)) // 8 * 8)
    cap = max(8, min(int(tile_rows_cap) // 8 * 8, vmem_rows))

    if n_packed >= 8:
        tile_rows = min(cap, (n_packed // 8) * 8)
        acc_rows = 8
        cover_tiles = _cdiv(n_packed, tile_rows)
        if n_cores > 1 and cover_tiles % n_cores:
            # Balance the two TensorCores: make the covering tile count a
            # multiple of n_cores (avoids a whole-tile straggler on v7x).
            target = _round_up(cover_tiles, n_cores)
            tile_rows = min(tile_rows,
                            max(8, _round_up(_cdiv(n_packed, target), 8)))
            cover_tiles = _cdiv(n_packed, tile_rows)
    else:
        tile_rows = n_packed
        acc_rows = tile_rows
        cover_tiles = 1

    tiles_per_core = _cdiv(cover_tiles, n_cores)

    mm_dtype = jnp.bfloat16 if kerns.dtype == jnp.bfloat16 else jnp.float32
    perm = jnp.asarray(_rot90_perm_matrix(k, G), dtype=mm_dtype)

    def x_index_map(c, t):
        # Clamp so the auto-DMA never reads a fully out-of-bounds block; the
        # redundant (clamped) tile is masked to zero inside the kernel.
        return (jnp.minimum(c * tiles_per_core + t, cover_tiles - 1), 0)

    kernel = functools.partial(
        _rot_inv_loss_kernel,
        n_packed=n_packed, tile_rows=tile_rows, acc_rows=acc_rows)

    # NOTE: input DMA uses the default double buffering; add
    # pipeline_mode=pl.Buffered(3) on the x BlockSpec only if a trace shows
    # exposed DMA (VMEM headroom now allows it).
    partials = pl.pallas_call(
        kernel,
        out_shape=jax.ShapeDtypeStruct((n_cores, 8, 128), jnp.float32),
        grid_spec=pltpu.PrefetchScalarGridSpec(
            num_scalar_prefetch=0,
            grid=(n_cores, tiles_per_core),
            in_specs=[
                pl.BlockSpec((tile_rows, W), x_index_map),
                pl.BlockSpec((W, W), lambda c, t: (0, 0)),
            ],
            out_specs=pl.BlockSpec((1, 8, 128), lambda c, t: (c, 0, 0)),
            scratch_shapes=[pltpu.VMEM((acc_rows, W), jnp.float32)],
        ),
        compiler_params=pltpu.CompilerParams(
            dimension_semantics=("parallel", "arbitrary"),
            vmem_limit_bytes=48 * 1024 * 1024,
        ),
    )(x, perm)

    # Combine per-core partial sums; divide by the TRUE element count.
    return jnp.sum(partials[:, 0, 0]) / jnp.float32(n_rows * kk)


def _reference(kerns):
    # pure-JAX reference mirroring the PyTorch module
    rot = jnp.swapaxes(jnp.flip(kerns, -1), -2, -1)
    kh, kw = kerns.shape[-2:]
    return jnp.mean(
        (rot.reshape(-1, kh, kw).astype(jnp.float32)
         - kerns.reshape(-1, kh, kw).astype(jnp.float32)) ** 2)


if __name__ == "__main__":
    key = jax.random.PRNGKey(0)
    # synthetic conv-kernel bank: (batch=2, channels=4, KH=5, KW=5)
    kerns = jax.random.normal(key, (2, 4, 5, 5), dtype=jnp.float32)

    loss = jax.jit(rotation_invariance_loss)(kerns)
    loss = jax.block_until_ready(loss)

    ref = _reference(kerns)
    assert np.allclose(np.asarray(loss), np.asarray(ref), rtol=1e-5, atol=1e-6), (loss, ref)
    print("KERNEL_OK")
</pallas_src>

<mosaic_0001>
module attributes {stable_mosaic.version = 11 : i64} {
  func.func @_rot_inv_loss_kernel(%arg0: i32, %arg1: i32, %arg2: memref<2x100xf32, #tpu.memory_space<vmem>>, %arg3: memref<100x100xf32, #tpu.memory_space<vmem>>, %arg4: memref<1x8x128xf32, #tpu.memory_space<vmem>>, %arg5: memref<2x100xf32, #tpu.memory_space<vmem>>) attributes {dimension_semantics = [#tpu.dimension_semantics<parallel>, #tpu.dimension_semantics<arbitrary>], iteration_bounds = array<i64: 1, 1>, scalar_prefetch = 0 : i64, scratch_operands = 1 : i64, tpu.core_type = #tpu.core_type<tc>, window_params = [{transform_indices = @transform_0, window_bounds = array<i64: 2, 100>}, {pipeline_mode = #tpu.pipeline_mode<synchronous>, transform_indices = @transform_1, window_bounds = array<i64: 100, 100>}, {transform_indices = @transform_2, window_bounds = array<i64: 1, 8, 128>}]} {
    %c0_i32 = arith.constant 0 : i32
    %0 = arith.cmpi eq, %arg1, %c0_i32 : i32
    %1 = arith.extui %0 : i1 to i32
    %c0_i32_0 = arith.constant 0 : i32
    %2 = arith.cmpi ne, %1, %c0_i32_0 : i32
    scf.if %2 {
      %cst = arith.constant 0.000000e+00 : f32
      %16 = vector.broadcast %cst : f32 to vector<2x100xf32>
      %c0 = arith.constant 0 : index
      %c0_7 = arith.constant 0 : index
      %17 = vector.load %arg5[%c0, %c0_7] : memref<2x100xf32, #tpu.memory_space<vmem>>, vector<2x100xf32>
      tpu.vector_store %arg5[%c0, %c0_7], %16 {strides = array<i32>} : memref<2x100xf32, #tpu.memory_space<vmem>>, vector<2x100xf32>,
    } else {
    }
    %c1_i32 = arith.constant 1 : i32
    %3 = arith.muli %arg0, %c1_i32 : i32
    %4 = arith.addi %3, %arg1 : i32
    %c2_i32 = arith.constant 2 : i32
    %5 = arith.muli %4, %c2_i32 : i32
    %c2_i32_1 = arith.constant 2 : i32
    %6 = arith.addi %5, %c2_i32_1 : i32
    %c2_i32_2 = arith.constant 2 : i32
    %7 = arith.cmpi sle, %6, %c2_i32_2 : i32
    %8 = arith.extui %7 : i1 to i32
    %c0_i32_3 = arith.constant 0 : i32
    %9 = arith.cmpi ne, %8, %c0_i32_3 : i32
    scf.if %9 {
      %c0 = arith.constant 0 : index
      %c0_7 = arith.constant 0 : index
      %16 = vector.load %arg2[%c0, %c0_7] : memref<2x100xf32, #tpu.memory_space<vmem>>, vector<2x100xf32>
      %c0_8 = arith.constant 0 : index
      %c0_9 = arith.constant 0 : index
      %17 = vector.load %arg3[%c0_8, %c0_9] : memref<100x100xf32, #tpu.memory_space<vmem>>, vector<100x100xf32>
      %cst = arith.constant dense<0.000000e+00> : vector<2x100xf32>
      %18 = tpu.matmul %16, %17, %cst {dimension_numbers = #tpu.dot_dimension_numbers<[1], [0], [0], [1], [0, 0, 1, 1], [], []>} : vector<2x100xf32>, vector<100x100xf32>, vector<2x100xf32> -> vector<2x100xf32>
      %19 = arith.subf %18, %16 : vector<2x100xf32>
      %20 = arith.mulf %19, %19 : vector<2x100xf32>
      %c0_10 = arith.constant 0 : index
      %c0_11 = arith.constant 0 : index
      %21 = vector.load %arg5[%c0_10, %c0_11] : memref<2x100xf32, #tpu.memory_space<vmem>>, vector<2x100xf32>
      %22 = vector.shape_cast %20 : vector<2x100xf32> to vector<1x2x100xf32>
      %cst_12 = arith.constant dense<0.000000e+00> : vector<2x100xf32>
      %23 = vector.multi_reduction <add>, %22, %cst_12 [0] : vector<1x2x100xf32> to vector<2x100xf32>
      %24 = arith.addf %21, %23 : vector<2x100xf32>
      %c0_13 = arith.constant 0 : index
      %c0_14 = arith.constant 0 : index
      %25 = vector.load %arg5[%c0_13, %c0_14] : memref<2x100xf32, #tpu.memory_space<vmem>>, vector<2x100xf32>
      tpu.vector_store %arg5[%c0_13, %c0_14], %24 {strides = array<i32>} : memref<2x100xf32, #tpu.memory_space<vmem>>, vector<2x100xf32>,
    } else {
    }
    %true = arith.constant true
    %10 = arith.xori %7, %true : i1
    %11 = arith.extui %10 : i1 to i32
    %c0_i32_4 = arith.constant 0 : i32
    %12 = arith.cmpi ne, %11, %c0_i32_4 : i32
    scf.if %12 {
      %16 = tpu.iota {dimensions = array<i32: 0>} : vector<2x100xi32>
      %17 = vector.broadcast %5 : i32 to vector<2x100xi32>
      %18 = arith.addi %17, %16 : vector<2x100xi32>
      %c2_i32_7 = arith.constant 2 : i32
      %19 = vector.broadcast %c2_i32_7 : i32 to vector<2x100xi32>
      %20 = arith.cmpi slt, %18, %19 : vector<2x100xi32>
      %c0 = arith.constant 0 : index
      %c0_8 = arith.constant 0 : index
      %21 = vector.load %arg2[%c0, %c0_8] : memref<2x100xf32, #tpu.memory_space<vmem>>, vector<2x100xf32>
      %cst = arith.constant 0.000000e+00 : f32
      %22 = vector.broadcast %cst : f32 to vector<2x100xf32>
      %23 = arith.select %20, %21, %22 : vector<2x100xi1>, vector<2x100xf32>
      %c0_9 = arith.constant 0 : index
      %c0_10 = arith.constant 0 : index
      %24 = vector.load %arg3[%c0_9, %c0_10] : memref<100x100xf32, #tpu.memory_space<vmem>>, vector<100x100xf32>
      %cst_11 = arith.constant dense<0.000000e+00> : vector<2x100xf32>
      %25 = tpu.matmul %23, %24, %cst_11 {dimension_numbers = #tpu.dot_dimension_numbers<[1], [0], [0], [1], [0, 0, 1, 1], [], []>} : vector<2x100xf32>, vector<100x100xf32>, vector<2x100xf32> -> vector<2x100xf32>
      %26 = arith.subf %25, %23 : vector<2x100xf32>
      %27 = arith.mulf %26, %26 : vector<2x100xf32>
      %c0_12 = arith.constant 0 : index
      %c0_13 = arith.constant 0 : index
      %28 = vector.load %arg5[%c0_12, %c0_13] : memref<2x100xf32, #tpu.memory_space<vmem>>, vector<2x100xf32>
      %29 = vector.shape_cast %27 : vector<2x100xf32> to vector<1x2x100xf32>
      %cst_14 = arith.constant dense<0.000000e+00> : vector<2x100xf32>
      %30 = vector.multi_reduction <add>, %29, %cst_14 [0] : vector<1x2x100xf32> to vector<2x100xf32>
      %31 = arith.addf %28, %30 : vector<2x100xf32>
      %c0_15 = arith.constant 0 : index
      %c0_16 = arith.constant 0 : index
      %32 = vector.load %arg5[%c0_15, %c0_16] : memref<2x100xf32, #tpu.memory_space<vmem>>, vector<2x100xf32>
      tpu.vector_store %arg5[%c0_15, %c0_16], %31 {strides = array<i32>} : memref<2x100xf32, #tpu.memory_space<vmem>>, vector<2x100xf32>,
    } else {
    }
    %c0_i32_5 = arith.constant 0 : i32
    %13 = arith.cmpi eq, %arg1, %c0_i32_5 : i32
    %14 = arith.extui %13 : i1 to i32
    %c0_i32_6 = arith.constant 0 : i32
    %15 = arith.cmpi ne, %14, %c0_i32_6 : i32
    scf.if %15 {
      %c0 = arith.constant 0 : index
      %c0_7 = arith.constant 0 : index
      %16 = vector.load %arg5[%c0, %c0_7] : memref<2x100xf32, #tpu.memory_space<vmem>>, vector<2x100xf32>
      %17 = vector.shape_cast %16 : vector<2x100xf32> to vector<1x2x100xf32>
      %cst = arith.constant dense<0.000000e+00> : vector<1xf32>
      %18 = vector.multi_reduction <add>, %17, %cst [1, 2] : vector<1x2x100xf32> to vector<1xf32>
      %19 = vector.shape_cast %18 : vector<1xf32> to vector<1x1x1xf32>
      %20 = vector.extract %19[0, 0, 0] : f32 from vector<1x1x1xf32>
      %21 = vector.broadcast %20 : f32 to vector<1x8x128xf32>
      %c0_8 = arith.constant 0 : index
      %c0_9 = arith.constant 0 : index
      %c0_10 = arith.constant 0 : index
      %22 = vector.load %arg4[%c0_8, %c0_9, %c0_10] : memref<1x8x128xf32, #tpu.memory_space<vmem>>, vector<1x8x128xf32>
      tpu.vector_store %arg4[%c0_8, %c0_9, %c0_10], %21 {strides = array<i32>} : memref<1x8x128xf32, #tpu.memory_space<vmem>>, vector<1x8x128xf32>,
    } else {
    }
    return
  }
  func.func @transform_0(%arg0: i32, %arg1: i32) -> (i32, i32) {
    %c1_i32 = arith.constant 1 : i32
    %0 = arith.muli %arg0, %c1_i32 : i32
    %1 = arith.addi %0, %arg1 : i32
    %c0_i32 = arith.constant 0 : i32
    %2 = arith.minsi %1, %c0_i32 : i32
    %c0_i32_0 = arith.constant 0 : i32
    %c0_i32_1 = arith.constant 0 : i32
    return %2, %c0_i32_0 : i32, i32
  }
  func.func @transform_1(%arg0: i32, %arg1: i32) -> (i32, i32) {
    %c0_i32 = arith.constant 0 : i32
    %c0_i32_0 = arith.constant 0 : i32
    %c0_i32_1 = arith.constant 0 : i32
    return %c0_i32, %c0_i32_0 : i32, i32
  }
  func.func @transform_2(%arg0: i32, %arg1: i32) -> (i32, i32, i32) {
    %c0_i32 = arith.constant 0 : i32
    %c0_i32_0 = arith.constant 0 : i32
    %c0_i32_1 = arith.constant 0 : i32
    return %arg0, %c0_i32, %c0_i32_0 : i32, i32, i32
  }
}

</mosaic_0001>

<llo_original>
// kernel: rotation_invariance_loss.1
$region0: #{rotation_invariance_loss.1}
  #allocation0 [shape = 'u32[]', space=smem, size = 0x4, offset = 0x4, fixed_abs, tag = 'smem constant byte address 0x4 - core index']
  #allocation1 [shape = 'u32[144,128]{1,0:T(1,128)}', space=vmem, size = 0x12000, scoped, tag = 'internal scratch']
  #allocation2 [shape = 'f32[2,100]{1,0:T(2,128)}', space=vmem, size = 0x400, scoped, tag = 'scratch operand']
  %s0 = inlined_call_operand.vmem [shape: f32[2,100], index: 0, kind: input, shape index: {}]
  %s1 = inlined_call_operand.vmem [shape: f32[100,100], index: 1, kind: input, shape index: {}]
  %s2 = inlined_call_operand.vmem [shape: f32[1,8,128], index: 2, kind: output, shape index: {}]
  %s3 = sld [smem:[#allocation0]]
  $region34: #{rotation_invariance_loss.1} parent=0
    _
  %s5 = ssub.s32 1, %s3
  %s6 = scalar_select 0, %s5, %s3
  // Predicated region
  $region2: #{rotation_invariance_loss.1} parent=0 // pred_check
    _
  $region3: #{rotation_invariance_loss.1} parent=0 // pred_check_branch
    %8 = sbr.rel (0) target = $region5
  $region4: #{rotation_invariance_loss.1} parent=0 // pred_region
    %s9 = sadd.s32 0, 0
    %p10 = scmp.lt.s32.totalorder %s9, 0
    %s11 = scalar_select %p10, %s9, 0
    %p12 = scmp.lt.s32.totalorder %s11, 0
    %s13 = scalar_select %p12, %s11, 0
    %s14 = smul.addr %s13, 2
    %s15 = scalar_lea.vmem %s0, %s14
    %s16 = sadd.s32 0, 0
    %p17 = scmp.lt.s32.totalorder %s16, 0
    %s18 = scalar_select %p17, %s16, 0
  $region5: #{rotation_invariance_loss.1} parent=0 // pred_fallthru
    _
  // Predicated region
  $region6: #{rotation_invariance_loss.1} parent=0 // pred_check
    _
  $region7: #{rotation_invariance_loss.1} parent=0 // pred_check_branch
    %20 = sbr.rel (0) target = $region9
  $region8: #{rotation_invariance_loss.1} parent=0 // pred_region
    _
  $region9: #{rotation_invariance_loss.1} parent=0 // pred_fallthru
    _
  %s21 = sadd.s32 0, 0
  %p22 = scmp.lt.s32.totalorder %s21, 0
  %s23 = scalar_select %p22, %s21, 0
  %p24 = scmp.lt.s32.totalorder %s23, 0
  %s25 = scalar_select %p24, %s23, 0
  %s26 = smul.addr %s25, 2
  %s27 = scalar_lea.vmem %s0, %s26
  %s28 = sadd.s32 0, 0
  %p29 = scmp.lt.s32.totalorder %s28, 0
  %s30 = scalar_select %p29, %s28, 0
  %p31 = scmp.lt.s32.totalorder %s30, 0
  %s32 = scalar_select %p31, %s30, 0
  %s33 = smul.addr %s32, 2
  %s34 = scalar_lea.vmem %s0, %s33
  %s35 = sadd.s32 0, 0
  %p36 = scmp.lt.s32.totalorder %s35, 0
  %s37 = scalar_select %p36, %s35, 0
  %p38 = scmp.eq.s32.totalorder 0, 0
  // Predicated region
  $region10: #{rotation_invariance_loss.1} parent=0 // pred_check
    %p39 = pneg %p38
  $region11: #{rotation_invariance_loss.1} parent=0 // pred_check_branch
    %41 = sbr.rel (%p39) target = $region13
  $region12: #{rotation_invariance_loss.1} parent=0 // pred_region
    %vm42 = vcmask 812032
    %43 = vst.msk [vmem:[#allocation2] sm:$0x3] %vm42, 0.0
  $region13: #{rotation_invariance_loss.1} parent=0 // pred_fallthru
    _
  %s44 = sadd.s32 0, 0
  %s45 = smul.u32 %s44, 2
  %s46 = sadd.s32 %s45, 2
  %p47 = scmp.le.s32.totalorder %s46, 2
  // Predicated region
  $region14: #{rotation_invariance_loss.1} parent=0 // pred_check
    %p48 = pneg %p47
  $region15: #{rotation_invariance_loss.1} parent=0 // pred_check_branch
    %50 = sbr.rel (%p48) target = $region17
  $region16: #{rotation_invariance_loss.1} parent=0 // pred_region
    %v51 = vld [vmem:[%s34] sm:$0x3]
    %v52 = vld [vmem:[%s1] sm:$0xff]
    %v53 = vld [vmem:[%s1 + $0x8] sm:$0xff]
    %v54 = vld [vmem:[%s1 + $0x10] sm:$0xff]
    %v55 = vld [vmem:[%s1 + $0x18] sm:$0xff]
    %v56 = vld [vmem:[%s1 + $0x20] sm:$0xff]
    %v57 = vld [vmem:[%s1 + $0x28] sm:$0xff]
    %v58 = vld [vmem:[%s1 + $0x30] sm:$0xff]
    %v59 = vld [vmem:[%s1 + $0x38] sm:$0xff]
    %v60 = vld [vmem:[%s1 + $0x40] sm:$0xff]
    %v61 = vld [vmem:[%s1 + $0x48] sm:$0xff]
    %v62 = vld [vmem:[%s1 + $0x50] sm:$0xff]
    %v63 = vld [vmem:[%s1 + $0x58] sm:$0xff]
    %v64 = vld [vmem:[%s1 + $0x60] sm:$0xf]
    %vm65 = vcmask 818176
    %v67 = vsel %vm65, %v51, 0
    %vm69 = vcmask 1043456
    %v71 = vsel %vm69, %v64, 0
    %73 = vmatprep.subr.mxu0 0.0
    %74 = vmatpush1.msra.mxu0 0.0
    %75 = vmatprep.subr.mxu0 0.0
    %76 = vmatpush1.msra.mxu0 0.0
    %77 = vmatprep.subr.mxu0 0.0
    %78 = vmatpush1.msra.mxu0 0.0
    %79 = vmatprep.subr.mxu0 0.0
    %80 = vmatpush1.msra.mxu0 %v71
    %81 = vmatprep.subr.mxu0 0.0
    %82 = vmatpush1.msra.mxu0 %v63
    %83 = vmatprep.subr.mxu0 0.0
    %84 = vmatpush1.msra.mxu0 %v62
    %85 = vmatprep.subr.mxu0 0.0
    %86 = vmatpush1.msra.mxu0 %v61
    %87 = vmatprep.subr.mxu0 0.0
    %88 = vmatpush1.msra.mxu0 %v60
    %89 = vmatprep.subr.mxu0 0.0
    %90 = vmatpush1.msra.mxu0 %v59
    %91 = vmatprep.subr.mxu0 0.0
    %92 = vmatpush1.msra.mxu0 %v58
    %93 = vmatprep.subr.mxu0 0.0
    %94 = vmatpush1.msra.mxu0 %v57
    %95 = vmatprep.subr.mxu0 0.0
    %96 = vmatpush1.msra.mxu0 %v56
    %97 = vmatprep.subr.mxu0 0.0
    %98 = vmatpush1.msra.mxu0 %v55
    %99 = vmatprep.subr.mxu0 0.0
    %100 = vmatpush1.msra.mxu0 %v54
    %101 = vmatprep.subr.mxu0 0.0
    %102 = vmatpush1.msra.mxu0 %v53
    %103 = vmatprep.subr.mxu0 0.0
    %104 = vmatpush1.msra.mxu0 %v52
    %105 = vmatprep.subr.mxu0 0.0
    %106 = vmatpush2.msra.mxu0 0.0
    %107 = vmatprep.subr.mxu0 0.0
    %108 = vmatpush2.msra.mxu0 0.0
    %109 = vmatprep.subr.mxu0 0.0
    %110 = vmatpush2.msra.mxu0 0.0
    %111 = vmatprep.subr.mxu0 0.0
    %112 = vmatpush2.msra.mxu0 0.0
    %113 = vmatprep.subr.mxu0 0.0
    %114 = vmatpush2.msra.mxu0 0.0
    %115 = vmatprep.subr.mxu0 0.0
    %116 = vmatpush2.msra.mxu0 0.0
    %117 = vmatprep.subr.mxu0 0.0
    %118 = vmatpush2.msra.mxu0 0.0
    %119 = vmatprep.subr.mxu0 0.0
    %120 = vmatpush2.msra.mxu0 0.0
    %121 = vmatprep.subr.mxu0 0.0
    %122 = vmatpush2.msra.mxu0 0.0
    %123 = vmatprep.subr.mxu0 0.0
    %124 = vmatpush2.msra.mxu0 0.0
    %125 = vmatprep.subr.mxu0 0.0
    %126 = vmatpush2.msra.mxu0 0.0
    %127 = vmatprep.subr.mxu0 0.0
    %128 = vmatpush2.msra.mxu0 0.0
    %129 = vmatprep.subr.mxu0 0.0
    %130 = vmatpush2.msra.mxu0 0.0
    %131 = vmatprep.subr.mxu0 0.0
    %132 = vmatpush2.msra.mxu0 0.0
    %133 = vmatprep.subr.mxu0 0.0
    %134 = vmatpush2.msra.mxu0 0.0
    %135 = vmatprep.subr.mxu0 0.0
    %136 = vmatpush2.msra.mxu0 0.0
    %137 = vmatprep.mubr.f32.mxu0 0.0
    %138 = vmatmul.mubr.f32.gmra.mxu0 %v67
    %v139 = vpop.f32.mrf.mxu0
    %v140 = vadd.f32 0.0, %v139
    %v141 = vpop.f32.mrf.mxu0
    %142 = vdwg.mxu0
    %v143 = vsub.f32 %v140, %v51
    %v144 = vmul.f32 %v143, %v143
    %v145 = vld [vmem:[#allocation2] sm:$0x3]
    %v146 = vadd.f32 %v144, 0.0
    %v147 = vadd.f32 %v145, %v146
    %vm148 = vcmask 812032
    %149 = vst.msk [vmem:[#allocation2] sm:$0x3] %vm148, %v147
  $region17: #{rotation_invariance_loss.1} parent=0 // pred_fallthru
    _
  %p150 = scmp.gt.s32.totalorder %s46, 2
  // Predicated region
  $region18: #{rotation_invariance_loss.1} parent=0 // pred_check
    %p151 = pneg %p150
  $region19: #{rotation_invariance_loss.1} parent=0 // pred_check_branch
    %153 = sbr.rel (%p151) target = $region21
  $region20: #{rotation_invariance_loss.1} parent=0 // pred_region
    %v154 = vlaneseq
    %v155 = vshrl.u32 %v154, 7
    %v156 = vstv %s45
    %v157 = vadd.s32 %v156, %v155
    %vm158 = vcmp.lt.s32.totalorder %v157, 2
    %v159 = vld [vmem:[%s34] sm:$0x3]
    %v160 = vsel %vm158, %v159, 0.0
    %v161 = vld [vmem:[%s1] sm:$0xff]
    %v162 = vld [vmem:[%s1 + $0x8] sm:$0xff]
    %v163 = vld [vmem:[%s1 + $0x10] sm:$0xff]
    %v164 = vld [vmem:[%s1 + $0x18] sm:$0xff]
    %v165 = vld [vmem:[%s1 + $0x20] sm:$0xff]
    %v166 = vld [vmem:[%s1 + $0x28] sm:$0xff]
    %v167 = vld [vmem:[%s1 + $0x30] sm:$0xff]
    %v168 = vld [vmem:[%s1 + $0x38] sm:$0xff]
    %v169 = vld [vmem:[%s1 + $0x40] sm:$0xff]
    %v170 = vld [vmem:[%s1 + $0x48] sm:$0xff]
    %v171 = vld [vmem:[%s1 + $0x50] sm:$0xff]
    %v172 = vld [vmem:[%s1 + $0x58] sm:$0xff]
    %v173 = vld [vmem:[%s1 + $0x60] sm:$0xf]
    %vm174 = vcmask 818176
    %v176 = vsel %vm174, %v160, 0
    %vm178 = vcmask 1043456
    %v180 = vsel %vm178, %v173, 0
    %182 = vmatprep.subr.mxu0 0.0
    %183 = vmatpush1.msra.mxu0 0.0
    %184 = vmatprep.subr.mxu0 0.0
    %185 = vmatpush1.msra.mxu0 0.0
    %186 = vmatprep.subr.mxu0 0.0
    %187 = vmatpush1.msra.mxu0 0.0
    %188 = vmatprep.subr.mxu0 0.0
    %189 = vmatpush1.msra.mxu0 %v180
    %190 = vmatprep.subr.mxu0 0.0
    %191 = vmatpush1.msra.mxu0 %v172
    %192 = vmatprep.subr.mxu0 0.0
    %193 = vmatpush1.msra.mxu0 %v171
    %194 = vmatprep.subr.mxu0 0.0
    %195 = vmatpush1.msra.mxu0 %v170
    %196 = vmatprep.subr.mxu0 0.0
    %197 = vmatpush1.msra.mxu0 %v169
    %198 = vmatprep.subr.mxu0 0.0
    %199 = vmatpush1.msra.mxu0 %v168
    %200 = vmatprep.subr.mxu0 0.0
    %201 = vmatpush1.msra.mxu0 %v167
    %202 = vmatprep.subr.mxu0 0.0
    %203 = vmatpush1.msra.mxu0 %v166
    %204 = vmatprep.subr.mxu0 0.0
    %205 = vmatpush1.msra.mxu0 %v165
    %206 = vmatprep.subr.mxu0 0.0
    %207 = vmatpush1.msra.mxu0 %v164
    %208 = vmatprep.subr.mxu0 0.0
    %209 = vmatpush1.msra.mxu0 %v163
    %210 = vmatprep.subr.mxu0 0.0
    %211 = vmatpush1.msra.mxu0 %v162
    %212 = vmatprep.subr.mxu0 0.0
    %213 = vmatpush1.msra.mxu0 %v161
    %214 = vmatprep.subr.mxu0 0.0
    %215 = vmatpush2.msra.mxu0 0.0
    %216 = vmatprep.subr.mxu0 0.0
    %217 = vmatpush2.msra.mxu0 0.0
    %218 = vmatprep.subr.mxu0 0.0
    %219 = vmatpush2.msra.mxu0 0.0
    %220 = vmatprep.subr.mxu0 0.0
    %221 = vmatpush2.msra.mxu0 0.0
    %222 = vmatprep.subr.mxu0 0.0
    %223 = vmatpush2.msra.mxu0 0.0
    %224 = vmatprep.subr.mxu0 0.0
    %225 = vmatpush2.msra.mxu0 0.0
    %226 = vmatprep.subr.mxu0 0.0
    %227 = vmatpush2.msra.mxu0 0.0
    %228 = vmatprep.subr.mxu0 0.0
    %229 = vmatpush2.msra.mxu0 0.0
    %230 = vmatprep.subr.mxu0 0.0
    %231 = vmatpush2.msra.mxu0 0.0
    %232 = vmatprep.subr.mxu0 0.0
    %233 = vmatpush2.msra.mxu0 0.0
    %234 = vmatprep.subr.mxu0 0.0
    %235 = vmatpush2.msra.mxu0 0.0
    %236 = vmatprep.subr.mxu0 0.0
    %237 = vmatpush2.msra.mxu0 0.0
    %238 = vmatprep.subr.mxu0 0.0
    %239 = vmatpush2.msra.mxu0 0.0
    %240 = vmatprep.subr.mxu0 0.0
    %241 = vmatpush2.msra.mxu0 0.0
    %242 = vmatprep.subr.mxu0 0.0
    %243 = vmatpush2.msra.mxu0 0.0
    %244 = vmatprep.subr.mxu0 0.0
    %245 = vmatpush2.msra.mxu0 0.0
    %246 = vmatprep.mubr.f32.mxu0 0.0
    %247 = vmatmul.mubr.f32.gmra.mxu0 %v176
    %v248 = vpop.f32.mrf.mxu0
    %v249 = vadd.f32 0.0, %v248
    %v250 = vpop.f32.mrf.mxu0
    %251 = vdwg.mxu0
    %v252 = vsub.f32 %v249, %v160
    %v253 = vmul.f32 %v252, %v252
    %v254 = vld [vmem:[#allocation2] sm:$0x3]
    %v255 = vadd.f32 %v253, 0.0
    %v256 = vadd.f32 %v254, %v255
    %vm257 = vcmask 812032
    %258 = vst.msk [vmem:[#allocation2] sm:$0x3] %vm257, %v256
  $region21: #{rotation_invariance_loss.1} parent=0 // pred_fallthru
    _
  // Predicated region
  $region22: #{rotation_invariance_loss.1} parent=0 // pred_check
    %p259 = pneg %p38
  $region23: #{rotation_invariance_loss.1} parent=0 // pred_check_branch
    %261 = sbr.rel (%p259) target = $region25
  $region24: #{rotation_invariance_loss.1} parent=0 // pred_region
    %v262 = vld [vmem:[#allocation2] sm:$0x3]
    %vm263 = vcmask 812032
    %v264 = vsel %vm263, %v262, 0.0
    %265 = vadd.xlane.f32.xlu0 %v264
    %v266 = vpop.xlane.xlu0 %265
    %v267 = vrot.slane %v266, 4
    %v268 = vadd.f32 %v266, %v267
    %v269 = vrot.slane %v268, 2
    %v270 = vadd.f32 %v268, %v269
    %v271 = vrot.slane %v270, 1
    %v272 = vadd.f32 %v270, %v271
    %s273 = vtos %v272
    %v274 = vstv %s273
    %275 = vst [vmem:[%s2] sm:$0xff] %v274
  $region25: #{rotation_invariance_loss.1} parent=0 // pred_fallthru
    _
  // Predicated region
  $region26: #{rotation_invariance_loss.1} parent=0 // pred_check
    _
  $region27: #{rotation_invariance_loss.1} parent=0 // pred_check_branch
    %277 = sbr.rel (0) target = $region29
  $region28: #{rotation_invariance_loss.1} parent=0 // pred_region
    _
  $region29: #{rotation_invariance_loss.1} parent=0 // pred_fallthru
    _
  // Predicated region
  $region30: #{rotation_invariance_loss.1} parent=0 // pred_check
    _
  $region31: #{rotation_invariance_loss.1} parent=0 // pred_check_branch
    %279 = sbr.rel (0) target = $region33
  $region32: #{rotation_invariance_loss.1} parent=0 // pred_region
    _
  $region33: #{rotation_invariance_loss.1} parent=0 // pred_fallthru
    _

</llo_original>
